<compile_context>
chip_gen: v7x
topology: tpu7x:2x2x1
jax: 0.10.0
libtpu: 0.0.40
codegen_flags: <defaults>
</compile_context>

<pallas_src>
import jax
import jax.numpy as jnp
import numpy as np
from jax import lax
from jax.experimental import pallas as pl
from jax.experimental.pallas import tpu as pltpu

PI2 = 2.0 * np.pi
SQRT_2 = float(np.sqrt(2.0))


def _cdiv(a, b):
    return -(-a // b)


def _round_up(a, b):
    return _cdiv(a, b) * b


def _sw_kernel(x_ref, w_ref, phi_ref, wt_ref, seg_ref, out_s_ref, out_ss_ref):
    """One tile of packed samples -> accumulate sum(s) and sum(s^2).

    x/w/phi : (tile, L) with L = g*m lanes (g samples packed per row)
    wt      : (tile, g)  |weight| per packed sample (0 for padding)
    seg     : (L, g)     constant segmented-sum selector, sqrt(2) folded in
    out_*   : (1, g)     resident accumulators (init at reduction step 0)
    """
    rff_feat = jnp.cos(w_ref[...] * x_ref[...] + phi_ref[...])       # VPU + EUP
    # Segmented lane-sum (each group of m lanes -> one column): rides the MXU.
    t = lax.dot_general(rff_feat, seg_ref[...], (((1,), (0,)), ((), ())),
                        preferred_element_type=jnp.float32)          # (tile, g)
    s = t * wt_ref[...]                                              # (tile, g)
    ps = jnp.sum(s, axis=0, keepdims=True)                           # (1, g)
    pss = jnp.sum(s * s, axis=0, keepdims=True)                      # (1, g)

    @pl.when(pl.program_id(1) == 0)                                  # per-split init
    def _():
        out_s_ref[...] = jnp.zeros_like(out_s_ref)
        out_ss_ref[...] = jnp.zeros_like(out_ss_ref)

    out_s_ref[...] += ps
    out_ss_ref[...] += pss


def sample_weighting_loss(features, weight, *, alpha=0.1, w=None, phi=None,
                          key=None, row_tile=1024, num_splits=1):
    """Forward pass of SampleWeighting.

    features: (n, m) float, weight: (bsz,) float parameter with bsz >= n.
    If w/phi are given they are the RFF parameters (exactly checkable path);
    otherwise they are drawn with jax.random (fresh randomness, like torch).
    num_splits: leading 'parallel' grid axis; keep 1 on v5e/v6e, 2 on v7x.
    """
    features = jnp.asarray(features, jnp.float32)
    n, m = features.shape
    if n < 2:
        raise ValueError("SampleWeighting needs n >= 2 (loss divides by n - 1).")
    weight = jnp.asarray(weight, jnp.float32)
    if weight.shape[0] < n:
        raise ValueError(f"weight has {weight.shape[0]} entries but n = {n}.")
    if (w is None) != (phi is None):
        raise ValueError("w and phi must be supplied together.")
    if w is None:
        key = jax.random.PRNGKey(0) if key is None else key
        kw, kp = jax.random.split(key)
        w = jax.random.normal(kw, (n, m), jnp.float32)
        phi = jax.random.uniform(kp, (n, m), jnp.float32, maxval=PI2)

    wt = jnp.abs(weight[:n])                       # abs(weight[:n]) as in torch

    # Lane packing: m < 128 leaves lanes idle -> pack g = floor(128/m) samples/row.
    g = max(1, 128 // m)
    L = g * m

    # Packed-row geometry; padded samples get weight 0 -> contribute nothing.
    r_rows = _cdiv(n, g)
    lane_pad = _round_up(L, 128)
    # VMEM cap: 3 streamed inputs x 2 pipeline buffers x lane_pad lanes x 4 B per
    # row, budgeted at ~12 MiB (safe under the 16/32 MiB scoped-VMEM defaults).
    cap_rows = max(8, ((12 << 20) // (3 * 2 * lane_pad * 4)) // 8 * 8)
    tile = max(8, min(_round_up(row_tile, 8), _round_up(r_rows, 8), cap_rows))
    tiles = _cdiv(r_rows, tile)
    ns = num_splits if (num_splits > 1 and tiles >= num_splits) else 1
    tiles = _round_up(tiles, ns)
    tps = tiles // ns                              # tiles per split (reduction len)
    r_pad = tiles * tile
    n_pad = r_pad * g

    def pack(a):                                   # (n, m) -> (r_pad, L)
        return jnp.pad(jnp.asarray(a, jnp.float32),
                       ((0, n_pad - n), (0, 0))).reshape(r_pad, L)

    x_p, w_p, phi_p = pack(features), pack(w), pack(phi)
    wt_p = jnp.pad(wt, (0, n_pad - n)).reshape(r_pad, g)
    # Constant segmented-sum selector (sqrt(2) folded in), computed on host.
    seg = jnp.asarray(np.kron(np.eye(g, dtype=np.float32),
                              np.ones((m, 1), dtype=np.float32)) * SQRT_2)

    row_map = lambda p, i: (p * tps + i, 0)
    x_spec = pl.BlockSpec((tile, L), row_map)
    wt_spec = pl.BlockSpec((tile, g), row_map)
    seg_spec = pl.BlockSpec((L, g), lambda p, i: (0, 0))       # fetched once
    out_spec = pl.BlockSpec((None, 1, g), lambda p, i: (p, 0, 0))

    out_s, out_ss = pl.pallas_call(
        _sw_kernel,
        out_shape=(jax.ShapeDtypeStruct((ns, 1, g), jnp.float32),
                   jax.ShapeDtypeStruct((ns, 1, g), jnp.float32)),
        grid_spec=pltpu.PrefetchScalarGridSpec(
            num_scalar_prefetch=0,
            grid=(ns, tps),
            in_specs=[x_spec, x_spec, x_spec, wt_spec, seg_spec],
            out_specs=(out_spec, out_spec)),
        compiler_params=pltpu.CompilerParams(
            dimension_semantics=("parallel", "arbitrary")),
    )(x_p, w_p, phi_p, wt_p, seg)

    # Tiny scalar glue: combine per-split partial vectors.
    #   cov.sum() = sum_k s_k^2 - (sum_k s_k)^2 / n
    a_sum = jnp.sum(out_s)
    b_sum = jnp.sum(out_ss)
    cov_sum = b_sum - (a_sum * a_sum) / jnp.float32(n)
    penalty = jnp.sum((wt - 1.0) ** 2)
    return cov_sum / jnp.float32(n - 1) + jnp.float32(alpha) * penalty


def _reference_loss(features, weight, w, phi, alpha=0.1):
    """Plain-JAX transcription of the torch forward (for validation)."""
    features = jnp.asarray(features, jnp.float32)
    n, m = features.shape
    wt = jnp.abs(jnp.asarray(weight, jnp.float32)[:n])
    rff_feat = SQRT_2 * jnp.cos(jnp.asarray(w, jnp.float32) * features
                                + jnp.asarray(phi, jnp.float32))
    weighted = rff_feat * wt[:, None]
    shifted = weighted - weighted.mean(axis=0)
    cov = jnp.matmul(shifted.T, shifted, precision=lax.Precision.HIGHEST)
    return cov.sum() / (n - 1) + alpha * jnp.sum((wt - 1.0) ** 2)


if __name__ == "__main__":
    alpha = 0.1
    ks = jax.random.split(jax.random.PRNGKey(0), 16)

    # Case 1: module-sized example (bsz = n = 8, m = 32), externally supplied
    # RFF params -> exact check against the plain-JAX reference.
    n1, m1 = 8, 32
    x1 = jax.random.normal(ks[0], (n1, m1), jnp.float32)
    wt1 = 1.0 + 0.05 * jax.random.normal(ks[1], (n1,), jnp.float32)
    w1 = jax.random.normal(ks[2], (n1, m1), jnp.float32)
    phi1 = jax.random.uniform(ks[3], (n1, m1), jnp.float32) * PI2
    got1 = jax.block_until_ready(
        sample_weighting_loss(x1, wt1, alpha=alpha, w=w1, phi=phi1))
    ref1 = _reference_loss(x1, wt1, w1, phi1, alpha)
    assert np.allclose(float(got1), float(ref1), rtol=1e-3, atol=1e-3), (got1, ref1)

    # Case 2: m = 48 (not a divisor of 128) -> generalized packing (g = 2),
    # multiple tiles, padding, and the 2-way sample split on the parallel axis.
    n2, m2 = 300, 48
    x2 = jax.random.normal(ks[4], (n2, m2), jnp.float32)
    wt2 = 1.0 + 0.1 * jax.random.normal(ks[5], (n2,), jnp.float32)
    w2 = jax.random.normal(ks[6], (n2, m2), jnp.float32)
    phi2 = jax.random.uniform(ks[7], (n2, m2), jnp.float32) * PI2
    got2 = jax.block_until_ready(
        sample_weighting_loss(x2, wt2, alpha=alpha, w=w2, phi=phi2,
                              row_tile=32, num_splits=2))
    ref2 = _reference_loss(x2, wt2, w2, phi2, alpha)
    assert np.allclose(float(got2), float(ref2), rtol=2e-3, atol=2e-3), (got2, ref2)

    # Case 3: m = 160 >= 128 -> no lane packing (g = 1), non-multiple-of-128 lanes.
    n3, m3 = 64, 160
    x3 = jax.random.normal(ks[8], (n3, m3), jnp.float32)
    wt3 = 1.0 + 0.1 * jax.random.normal(ks[9], (n3,), jnp.float32)
    w3 = jax.random.normal(ks[10], (n3, m3), jnp.float32)
    phi3 = jax.random.uniform(ks[11], (n3, m3), jnp.float32) * PI2
    got3 = jax.block_until_ready(
        sample_weighting_loss(x3, wt3, alpha=alpha, w=w3, phi=phi3))
    ref3 = _reference_loss(x3, wt3, w3, phi3, alpha)
    assert np.allclose(float(got3), float(ref3), rtol=2e-3, atol=2e-3), (got3, ref3)

    # Case 4: default path -- w/phi drawn by the wrapper (fresh randomness, as in
    # the torch module).  With weight == 1 the loss is the unbiased sample
    # variance of the per-row RFF sums, whose expectation is exactly m, so a
    # wide band is a safe structural check.
    n4, m4 = 2048, 32
    x4 = jax.random.normal(ks[12], (n4, m4), jnp.float32)
    wt4 = jnp.ones((n4,), jnp.float32)
    got4 = jax.block_until_ready(
        sample_weighting_loss(x4, wt4, alpha=alpha, key=ks[13]))
    v4 = float(got4)
    assert np.isfinite(v4) and 0.7 * m4 < v4 < 1.3 * m4, v4

    print("KERNEL_OK")
</pallas_src>

<mosaic_0001>
module attributes {stable_mosaic.version = 11 : i64} {
  func.func @_sw_kernel(%arg0: i32, %arg1: i32, %arg2: memref<8x128xf32, #tpu.memory_space<vmem>>, %arg3: memref<8x128xf32, #tpu.memory_space<vmem>>, %arg4: memref<8x128xf32, #tpu.memory_space<vmem>>, %arg5: memref<8x4xf32, #tpu.memory_space<vmem>>, %arg6: memref<128x4xf32, #tpu.memory_space<vmem>>, %arg7: memref<1x1x4xf32, #tpu.memory_space<vmem>>, %arg8: memref<1x1x4xf32, #tpu.memory_space<vmem>>) attributes {dimension_semantics = [#tpu.dimension_semantics<parallel>, #tpu.dimension_semantics<arbitrary>], iteration_bounds = array<i64: 1, 1>, scalar_prefetch = 0 : i64, scratch_operands = 0 : i64, tpu.core_type = #tpu.core_type<tc>, window_params = [{transform_indices = @transform_0, window_bounds = array<i64: 8, 128>}, {transform_indices = @transform_1, window_bounds = array<i64: 8, 128>}, {transform_indices = @transform_2, window_bounds = array<i64: 8, 128>}, {transform_indices = @transform_3, window_bounds = array<i64: 8, 4>}, {pipeline_mode = #tpu.pipeline_mode<synchronous>, transform_indices = @transform_4, window_bounds = array<i64: 128, 4>}, {transform_indices = @transform_5, window_bounds = array<i64: 1, 1, 4>}, {transform_indices = @transform_6, window_bounds = array<i64: 1, 1, 4>}]} {
    %c0 = arith.constant 0 : index
    %c0_0 = arith.constant 0 : index
    %0 = vector.load %arg3[%c0, %c0_0] : memref<8x128xf32, #tpu.memory_space<vmem>>, vector<8x128xf32>
    %c0_1 = arith.constant 0 : index
    %c0_2 = arith.constant 0 : index
    %1 = vector.load %arg2[%c0_1, %c0_2] : memref<8x128xf32, #tpu.memory_space<vmem>>, vector<8x128xf32>
    %2 = arith.mulf %0, %1 : vector<8x128xf32>
    %c0_3 = arith.constant 0 : index
    %c0_4 = arith.constant 0 : index
    %3 = vector.load %arg4[%c0_3, %c0_4] : memref<8x128xf32, #tpu.memory_space<vmem>>, vector<8x128xf32>
    %4 = arith.addf %2, %3 : vector<8x128xf32>
    %5 = math.cos %4 : vector<8x128xf32>
    %c0_5 = arith.constant 0 : index
    %c0_6 = arith.constant 0 : index
    %6 = vector.load %arg6[%c0_5, %c0_6] : memref<128x4xf32, #tpu.memory_space<vmem>>, vector<128x4xf32>
    %cst = arith.constant dense<0.000000e+00> : vector<8x4xf32>
    %7 = tpu.matmul %5, %6, %cst {dimension_numbers = #tpu.dot_dimension_numbers<[1], [0], [0], [1], [0, 0, 1, 1], [], []>} : vector<8x128xf32>, vector<128x4xf32>, vector<8x4xf32> -> vector<8x4xf32>
    %c0_7 = arith.constant 0 : index
    %c0_8 = arith.constant 0 : index
    %8 = vector.load %arg5[%c0_7, %c0_8] : memref<8x4xf32, #tpu.memory_space<vmem>>, vector<8x4xf32>
    %9 = arith.mulf %7, %8 : vector<8x4xf32>
    %cst_9 = arith.constant dense<0.000000e+00> : vector<4xf32>
    %10 = vector.multi_reduction <add>, %9, %cst_9 [0] : vector<8x4xf32> to vector<4xf32>
    %11 = vector.shape_cast %10 : vector<4xf32> to vector<1x4xf32>
    %12 = arith.mulf %9, %9 : vector<8x4xf32>
    %cst_10 = arith.constant dense<0.000000e+00> : vector<4xf32>
    %13 = vector.multi_reduction <add>, %12, %cst_10 [0] : vector<8x4xf32> to vector<4xf32>
    %14 = vector.shape_cast %13 : vector<4xf32> to vector<1x4xf32>
    %c0_i32 = arith.constant 0 : i32
    %15 = arith.cmpi eq, %arg1, %c0_i32 : i32
    %16 = arith.extui %15 : i1 to i32
    %c0_i32_11 = arith.constant 0 : i32
    %17 = arith.cmpi ne, %16, %c0_i32_11 : i32
    scf.if %17 {
      %cst_24 = arith.constant 0.000000e+00 : f32
      %30 = vector.broadcast %cst_24 : f32 to vector<1x4xf32>
      %c0_25 = arith.constant 0 : index
      %c0_26 = arith.constant 0 : index
      %c0_27 = arith.constant 0 : index
      %31 = vector.load %arg7[%c0_25, %c0_26, %c0_27] : memref<1x1x4xf32, #tpu.memory_space<vmem>>, vector<1x1x4xf32>
      %32 = vector.shape_cast %31 : vector<1x1x4xf32> to vector<1x4xf32>
      %33 = vector.shape_cast %30 : vector<1x4xf32> to vector<1x1x4xf32>
      tpu.vector_store %arg7[%c0_25, %c0_26, %c0_27], %33 {strides = array<i32>} : memref<1x1x4xf32, #tpu.memory_space<vmem>>, vector<1x1x4xf32>,
      %cst_28 = arith.constant 0.000000e+00 : f32
      %34 = vector.broadcast %cst_28 : f32 to vector<1x4xf32>
      %c0_29 = arith.constant 0 : index
      %c0_30 = arith.constant 0 : index
      %c0_31 = arith.constant 0 : index
      %35 = vector.load %arg8[%c0_29, %c0_30, %c0_31] : memref<1x1x4xf32, #tpu.memory_space<vmem>>, vector<1x1x4xf32>
      %36 = vector.shape_cast %35 : vector<1x1x4xf32> to vector<1x4xf32>
      %37 = vector.shape_cast %34 : vector<1x4xf32> to vector<1x1x4xf32>
      tpu.vector_store %arg8[%c0_29, %c0_30, %c0_31], %37 {strides = array<i32>} : memref<1x1x4xf32, #tpu.memory_space<vmem>>, vector<1x1x4xf32>,
    } else {
    }
    %c0_12 = arith.constant 0 : index
    %c0_13 = arith.constant 0 : index
    %c0_14 = arith.constant 0 : index
    %18 = vector.load %arg7[%c0_12, %c0_13, %c0_14] : memref<1x1x4xf32, #tpu.memory_space<vmem>>, vector<1x1x4xf32>
    %19 = vector.shape_cast %18 : vector<1x1x4xf32> to vector<1x4xf32>
    %20 = arith.addf %19, %11 : vector<1x4xf32>
    %c0_15 = arith.constant 0 : index
    %c0_16 = arith.constant 0 : index
    %c0_17 = arith.constant 0 : index
    %21 = vector.load %arg7[%c0_15, %c0_16, %c0_17] : memref<1x1x4xf32, #tpu.memory_space<vmem>>, vector<1x1x4xf32>
    %22 = vector.shape_cast %21 : vector<1x1x4xf32> to vector<1x4xf32>
    %23 = vector.shape_cast %20 : vector<1x4xf32> to vector<1x1x4xf32>
    tpu.vector_store %arg7[%c0_15, %c0_16, %c0_17], %23 {strides = array<i32>} : memref<1x1x4xf32, #tpu.memory_space<vmem>>, vector<1x1x4xf32>,
    %c0_18 = arith.constant 0 : index
    %c0_19 = arith.constant 0 : index
    %c0_20 = arith.constant 0 : index
    %24 = vector.load %arg8[%c0_18, %c0_19, %c0_20] : memref<1x1x4xf32, #tpu.memory_space<vmem>>, vector<1x1x4xf32>
    %25 = vector.shape_cast %24 : vector<1x1x4xf32> to vector<1x4xf32>
    %26 = arith.addf %25, %14 : vector<1x4xf32>
    %c0_21 = arith.constant 0 : index
    %c0_22 = arith.constant 0 : index
    %c0_23 = arith.constant 0 : index
    %27 = vector.load %arg8[%c0_21, %c0_22, %c0_23] : memref<1x1x4xf32, #tpu.memory_space<vmem>>, vector<1x1x4xf32>
    %28 = vector.shape_cast %27 : vector<1x1x4xf32> to vector<1x4xf32>
    %29 = vector.shape_cast %26 : vector<1x4xf32> to vector<1x1x4xf32>
    tpu.vector_store %arg8[%c0_21, %c0_22, %c0_23], %29 {strides = array<i32>} : memref<1x1x4xf32, #tpu.memory_space<vmem>>, vector<1x1x4xf32>,
    return
  }
  func.func @transform_0(%arg0: i32, %arg1: i32) -> (i32, i32) {
    %c1_i32 = arith.constant 1 : i32
    %0 = arith.muli %arg0, %c1_i32 : i32
    %1 = arith.addi %0, %arg1 : i32
    %c0_i32 = arith.constant 0 : i32
    %c0_i32_0 = arith.constant 0 : i32
    return %1, %c0_i32 : i32, i32
  }
  func.func @transform_1(%arg0: i32, %arg1: i32) -> (i32, i32) {
    %c1_i32 = arith.constant 1 : i32
    %0 = arith.muli %arg0, %c1_i32 : i32
    %1 = arith.addi %0, %arg1 : i32
    %c0_i32 = arith.constant 0 : i32
    %c0_i32_0 = arith.constant 0 : i32
    return %1, %c0_i32 : i32, i32
  }
  func.func @transform_2(%arg0: i32, %arg1: i32) -> (i32, i32) {
    %c1_i32 = arith.constant 1 : i32
    %0 = arith.muli %arg0, %c1_i32 : i32
    %1 = arith.addi %0, %arg1 : i32
    %c0_i32 = arith.constant 0 : i32
    %c0_i32_0 = arith.constant 0 : i32
    return %1, %c0_i32 : i32, i32
  }
  func.func @transform_3(%arg0: i32, %arg1: i32) -> (i32, i32) {
    %c1_i32 = arith.constant 1 : i32
    %0 = arith.muli %arg0, %c1_i32 : i32
    %1 = arith.addi %0, %arg1 : i32
    %c0_i32 = arith.constant 0 : i32
    %c0_i32_0 = arith.constant 0 : i32
    return %1, %c0_i32 : i32, i32
  }
  func.func @transform_4(%arg0: i32, %arg1: i32) -> (i32, i32) {
    %c0_i32 = arith.constant 0 : i32
    %c0_i32_0 = arith.constant 0 : i32
    %c0_i32_1 = arith.constant 0 : i32
    return %c0_i32, %c0_i32_0 : i32, i32
  }
  func.func @transform_5(%arg0: i32, %arg1: i32) -> (i32, i32, i32) {
    %c0_i32 = arith.constant 0 : i32
    %c0_i32_0 = arith.constant 0 : i32
    %c0_i32_1 = arith.constant 0 : i32
    return %arg0, %c0_i32, %c0_i32_0 : i32, i32, i32
  }
  func.func @transform_6(%arg0: i32, %arg1: i32) -> (i32, i32, i32) {
    %c0_i32 = arith.constant 0 : i32
    %c0_i32_0 = arith.constant 0 : i32
    %c0_i32_1 = arith.constant 0 : i32
    return %arg0, %c0_i32, %c0_i32_0 : i32, i32, i32
  }
}

</mosaic_0001>

<llo_original>
// kernel: tpu_custom_call.1
$region0: #{tpu_custom_call.1}
  #allocation0 [shape = 'u32[]', space=smem, size = 0x4, offset = 0x4, fixed_abs, tag = 'smem constant byte address 0x4 - core index']
  #allocation1 [shape = 'u32[144,128]{1,0:T(1,128)}', space=vmem, size = 0x12000, scoped, tag = 'internal scratch']
  %s0 = inlined_call_operand.vmem [shape: f32[8,128], index: 0, kind: input, shape index: {}]
  %s1 = inlined_call_operand.vmem [shape: f32[8,128], index: 1, kind: input, shape index: {}]
  %s2 = inlined_call_operand.vmem [shape: f32[8,128], index: 2, kind: input, shape index: {}]
  %s3 = inlined_call_operand.vmem [shape: f32[8,4], index: 3, kind: input, shape index: {}]
  %s4 = inlined_call_operand.vmem [shape: f32[128,4], index: 4, kind: input, shape index: {}]
  %s5 = inlined_call_operand.hbm [shape: f32[1,1,4], index: 5, kind: output, shape index: {0}]
  %s6 = inlined_call_operand.hbm [shape: f32[1,1,4], index: 6, kind: output, shape index: {1}]
  %7 = xla_tuple %s5, %s6
  %s8 = sld [smem:[#allocation0]]
  $region42: #{tpu_custom_call.1} parent=0
    _
  %s10 = ssub.s32 1, %s8
  %s11 = scalar_select 0, %s10, %s8
  $region1: #{tpu_custom_call.1} parent=0
    #allocation2 [shape = 'u8[512]{0}', space=vmem, size = 0x400, scoped, tag = 'output window, operand 0, single buffered']
    #allocation3 [shape = 's32[1]{0}', space=sflag, size = 0x4, scoped, tag = 'scoped memory for tpu_custom_call.1']
    #allocation4 [shape = 'u8[512]{0}', space=vmem, size = 0x400, scoped, tag = 'output window, operand 1, single buffered']
    #allocation5 [shape = 's32[1]{0}', space=sflag, size = 0x4, scoped, tag = 'scoped memory for tpu_custom_call.1']
    %12 = vsyncpa [#allocation3], 0
    %13 = vsyncpa [#allocation5], 0
    // Predicated region
    $region2: #{tpu_custom_call.1} parent=1 // pred_check
      _
    $region3: #{tpu_custom_call.1} parent=1 // pred_check_branch
      %15 = sbr.rel (0) target = $region5
    $region4: #{tpu_custom_call.1} parent=1 // pred_region
      %s16 = sadd.s32 0, 0
      %p17 = scmp.lt.s32.totalorder %s16, 0
      %s18 = scalar_select %p17, %s16, 0
      %s19 = smul.addr %s18, 8
      %s20 = scalar_lea.vmem %s0, %s19
      %s21 = sadd.s32 0, 0
    $region5: #{tpu_custom_call.1} parent=1 // pred_fallthru
      _
    // Predicated region
    $region6: #{tpu_custom_call.1} parent=1 // pred_check
      _
    $region7: #{tpu_custom_call.1} parent=1 // pred_check_branch
      %23 = sbr.rel (0) target = $region9
    $region8: #{tpu_custom_call.1} parent=1 // pred_region
      %s24 = sadd.s32 0, 0
      %p25 = scmp.lt.s32.totalorder %s24, 0
      %s26 = scalar_select %p25, %s24, 0
      %s27 = smul.addr %s26, 8
      %s28 = scalar_lea.vmem %s1, %s27
      %s29 = sadd.s32 0, 0
    $region9: #{tpu_custom_call.1} parent=1 // pred_fallthru
      _
    // Predicated region
    $region10: #{tpu_custom_call.1} parent=1 // pred_check
      _
    $region11: #{tpu_custom_call.1} parent=1 // pred_check_branch
      %31 = sbr.rel (0) target = $region13
    $region12: #{tpu_custom_call.1} parent=1 // pred_region
      %s32 = sadd.s32 0, 0
      %p33 = scmp.lt.s32.totalorder %s32, 0
      %s34 = scalar_select %p33, %s32, 0
      %s35 = smul.addr %s34, 8
      %s36 = scalar_lea.vmem %s2, %s35
      %s37 = sadd.s32 0, 0
    $region13: #{tpu_custom_call.1} parent=1 // pred_fallthru
      _
    // Predicated region
    $region14: #{tpu_custom_call.1} parent=1 // pred_check
      _
    $region15: #{tpu_custom_call.1} parent=1 // pred_check_branch
      %39 = sbr.rel (0) target = $region17
    $region16: #{tpu_custom_call.1} parent=1 // pred_region
      %s40 = sadd.s32 0, 0
      %p41 = scmp.lt.s32.totalorder %s40, 0
      %s42 = scalar_select %p41, %s40, 0
      %s43 = smul.addr %s42, 8
      %s44 = scalar_lea.vmem %s3, %s43
      %s45 = sadd.s32 0, 0
    $region17: #{tpu_custom_call.1} parent=1 // pred_fallthru
      _
    // Predicated region
    $region18: #{tpu_custom_call.1} parent=1 // pred_check
      _
    $region19: #{tpu_custom_call.1} parent=1 // pred_check_branch
      %47 = sbr.rel (0) target = $region21
    $region20: #{tpu_custom_call.1} parent=1 // pred_region
      _
    $region21: #{tpu_custom_call.1} parent=1 // pred_fallthru
      _
    %s48 = sadd.s32 0, 0
    %p49 = scmp.lt.s32.totalorder %s48, 0
    %s50 = scalar_select %p49, %s48, 0
    %s51 = smul.addr %s50, 8
    %s52 = scalar_lea.vmem %s0, %s51
    %s53 = sadd.s32 0, 0
    %p54 = scmp.lt.s32.totalorder %s53, 0
    %s55 = scalar_select %p54, %s53, 0
    %s56 = smul.addr %s55, 8
    %s57 = scalar_lea.vmem %s1, %s56
    %s58 = sadd.s32 0, 0
    %p59 = scmp.lt.s32.totalorder %s58, 0
    %s60 = scalar_select %p59, %s58, 0
    %s61 = smul.addr %s60, 8
    %s62 = scalar_lea.vmem %s2, %s61
    %s63 = sadd.s32 0, 0
    %p64 = scmp.lt.s32.totalorder %s63, 0
    %s65 = scalar_select %p64, %s63, 0
    %s66 = smul.addr %s65, 8
    %s67 = scalar_lea.vmem %s3, %s66
    %s68 = sadd.s32 0, 0
    %p69 = scmp.lt.s32.totalorder %s68, 0
    %s70 = scalar_select %p69, %s68, 0
    %s71 = smul.addr %s70, 8
    %s72 = scalar_lea.vmem %s0, %s71
    %s73 = sadd.s32 0, 0
    %s74 = sadd.s32 0, 0
    %p75 = scmp.lt.s32.totalorder %s74, 0
    %s76 = scalar_select %p75, %s74, 0
    %s77 = smul.addr %s76, 8
    %s78 = scalar_lea.vmem %s1, %s77
    %s79 = sadd.s32 0, 0
    %s80 = sadd.s32 0, 0
    %p81 = scmp.lt.s32.totalorder %s80, 0
    %s82 = scalar_select %p81, %s80, 0
    %s83 = smul.addr %s82, 8
    %s84 = scalar_lea.vmem %s2, %s83
    %s85 = sadd.s32 0, 0
    %s86 = sadd.s32 0, 0
    %p87 = scmp.lt.s32.totalorder %s86, 0
    %s88 = scalar_select %p87, %s86, 0
    %s89 = smul.addr %s88, 8
    %s90 = scalar_lea.vmem %s3, %s89
    %s91 = sadd.s32 0, 0
    %v92 = vld [vmem:[%s78] sm:$0xff]
    %v93 = vld [vmem:[%s72] sm:$0xff]
    %v94 = vmul.f32 %v92, %v93
    %v95 = vld [vmem:[%s84] sm:$0xff]
    %v96 = vadd.f32 %v94, %v95
    %v97 = vand.u32 2147483647, %v96
    %vm98 = vcmp.le.f32.partialorder %v97, 0.7853982
    %vm99 = vcmp.lt.s32.totalorder %v96, 0
    %v100 = vand.u32 %v96, 2139095040
    %v101 = vshrl.u32 %v100, 23
    %v102 = vsub.s32 %v101, 127
    %v103 = vand.u32 2147483647, %v96
    %v104 = vand.u32 %v103, 8388607
    %v105 = vor.u32 %v104, 8388608
    %v106 = vsub.s32 0, %v105
    %v107 = vadd.s32 %v102, 1
    %vm108 = vcmp.gt.s32.totalorder %v107, 0
    %v109 = vsel %vm108, %v107, 0
    %v110 = vshrl.u32 %v109, 5
    %v111 = vand.u32 %v109, 31
    %v112 = vsub.s32 32, %v111
    %v113 = vshrl.u32 683565275, %v112
    %v114 = vshll.u32 683565275, %v111
    %v115 = vshrl.u32 2475754826, %v112
    %v116 = vor.u32 %v114, %v115
    %v117 = vshll.u32 2475754826, %v111
    %v118 = vshrl.u32 2131351028, %v112
    %v119 = vor.u32 %v117, %v118
    %v120 = vshll.u32 2131351028, %v111
    %v121 = vshrl.u32 2102212464, %v112
    %v122 = vor.u32 %v120, %v121
    %v123 = vshll.u32 2102212464, %v111
    %v124 = vshrl.u32 920167782, %v112
    %v125 = vor.u32 %v123, %v124
    %v126 = vshll.u32 920167782, %v111
    %v127 = vshrl.u32 1326507024, %v112
    %v128 = vor.u32 %v126, %v127
    %vm129 = vcmp.lt.s32.totalorder %v110, 1
    %vm130 = vcmp.lt.s32.totalorder %v110, 2
    %vm131 = vcmp.lt.s32.totalorder %v110, 3
    %vm132 = vcmp.lt.s32.totalorder %v110, 4
    %v133 = vsel %vm129, %v113, %v116
    %v134 = vsel %vm132, %v122, 2102212464
    %v135 = vsel %vm131, %v119, %v134
    %v136 = vsel %vm130, %v133, %v135
    %v137 = vsel %vm129, %v116, %v119
    %v138 = vsel %vm132, %v125, 920167782
    %v139 = vsel %vm131, %v122, %v138
    %v140 = vsel %vm130, %v137, %v139
    %v141 = vsel %vm129, %v119, %v122
    %v142 = vsel %vm132, %v128, 1326507024
    %v143 = vsel %vm131, %v125, %v142
    %v144 = vsel %vm130, %v141, %v143
    %v145 = vshll.u32 %v105, 8
    %v146 = vmul.u32.u64.compose %v145, %v144
    %v147 = vextract.low.u32 %v146
    %v148 = vextract.high.u32 %v146
    %v149 = vmul.u32.u64.compose %v145, %v140
    %v150 = vextract.low.u32 %v149
    %v151 = vextract.high.u32 %v149
    %v152 = vmul.u32 %v145, %v136
    %v153 = vadd.s32 %v148, %v150
    %vm154 = vc.u32 %v148, %v150
    %v155 = vadd.s32 %v151, 1
    %v156 = vsel %vm154, %v155, %v151
    %v157 = vadd.s32 %v152, %v156
    %v158 = vadd.s32 %v157, 536870912
    %v159 = vshrl.u32 %v158, 30
    %v160 = vshll.u32 %v159, 30
    %v161 = vsub.s32 %v157, %v160
    %vm162 = vcmp.lt.s32.totalorder %v161, 0
    %v163 = vsub.s32 0, %v161
    %v164 = vsel %vm162, %v163, %v161
    %v165 = vclz %v164
    %v166 = vsub.s32 %v165, 2
    %vm167 = vcmp.gt.s32.totalorder 0, %v166
    %v168 = vsel %vm167, 0, %v166
    %v169 = vsub.s32 32, %v168
    %v170 = vshll.u32 %v161, %v168
    %v171 = vshrl.u32 %v153, %v169
    %v172 = vor.u32 %v170, %v171
    %v173 = vsub.s32 4294967266, %v168
    %v174 = vadd.s32 %v173, 127
    %v175 = vshll.u32 %v174, 23
    %v176 = vor.u32 4788187, %v175
    %v177 = vand.u32 2147483647, %v176
    %v179 = vcvt.s32.f32 %v172
    %v180 = vmul.f32 %v179, %v177
    %v181 = vxor.u32 %v180, 2147483648
    %v182 = vsel %vm99, %v181, %v180
    %v183 = vsub.s32 4, %v159
    %v184 = vsel %vm99, %v183, %v159
    %v185 = vsel %vm98, %v96, %v182
    %v186 = vsel %vm98, 0, %v184
    %v187 = vcosq.f32.pop %v185
    %v188 = vsinq.f32.pop %v185
    %vm189 = vweird.f32 %v96
    %v190 = vand.u32 %v186, 3
    %vm191 = vcmp.lt.s32.totalorder %v190, 2
    %vm192 = vcmp.eq.s32.totalorder %v190, 0
    %v193 = vxor.u32 %v188, 2147483648
    %v194 = vsel %vm192, %v187, %v193
    %vm195 = vcmp.eq.s32.totalorder %v190, 2
    %v196 = vxor.u32 %v187, 2147483648
    %v197 = vsel %vm195, %v196, %v188
    %v198 = vsel %vm191, %v194, %v197
    %v199 = vsel %vm189, nan, %v198
    %v200 = vld [vmem:[%s4] sm:$0xff]
    %v201 = vld [vmem:[%s4 + $0x8] sm:$0xff]
    %v202 = vld [vmem:[%s4 + $0x10] sm:$0xff]
    %v203 = vld [vmem:[%s4 + $0x18] sm:$0xff]
    %v204 = vld [vmem:[%s4 + $0x20] sm:$0xff]
    %v205 = vld [vmem:[%s4 + $0x28] sm:$0xff]
    %v206 = vld [vmem:[%s4 + $0x30] sm:$0xff]
    %v207 = vld [vmem:[%s4 + $0x38] sm:$0xff]
    %v208 = vld [vmem:[%s4 + $0x40] sm:$0xff]
    %v209 = vld [vmem:[%s4 + $0x48] sm:$0xff]
    %v210 = vld [vmem:[%s4 + $0x50] sm:$0xff]
    %v211 = vld [vmem:[%s4 + $0x58] sm:$0xff]
    %v212 = vld [vmem:[%s4 + $0x60] sm:$0xff]
    %v213 = vld [vmem:[%s4 + $0x68] sm:$0xff]
    %v214 = vld [vmem:[%s4 + $0x70] sm:$0xff]
    %v215 = vld [vmem:[%s4 + $0x78] sm:$0xff]
    %216 = vmatprep.subr.mxu0 0.0
    %217 = vmatpush1.msra.mxu0 %v200
    %218 = vmatprep.subr.mxu0 0.0
    %219 = vmatpush1.msra.mxu0 %v201
    %220 = vmatprep.subr.mxu0 0.0
    %221 = vmatpush1.msra.mxu0 %v202
    %222 = vmatprep.subr.mxu0 0.0
    %223 = vmatpush1.msra.mxu0 %v203
    %224 = vmatprep.subr.mxu0 0.0
    %225 = vmatpush1.msra.mxu0 %v204
    %226 = vmatprep.subr.mxu0 0.0
    %227 = vmatpush1.msra.mxu0 %v205
    %228 = vmatprep.subr.mxu0 0.0
    %229 = vmatpush1.msra.mxu0 %v206
    %230 = vmatprep.subr.mxu0 0.0
    %231 = vmatpush1.msra.mxu0 %v207
    %232 = vmatprep.subr.mxu0 0.0
    %233 = vmatpush1.msra.mxu0 %v208
    %234 = vmatprep.subr.mxu0 0.0
    %235 = vmatpush1.msra.mxu0 %v209
    %236 = vmatprep.subr.mxu0 0.0
    %237 = vmatpush1.msra.mxu0 %v210
    %238 = vmatprep.subr.mxu0 0.0
    %239 = vmatpush1.msra.mxu0 %v211
    %240 = vmatprep.subr.mxu0 0.0
    %241 = vmatpush1.msra.mxu0 %v212
    %242 = vmatprep.subr.mxu0 0.0
    %243 = vmatpush1.msra.mxu0 %v213
    %244 = vmatprep.subr.mxu0 0.0
    %245 = vmatpush1.msra.mxu0 %v214
    %246 = vmatprep.subr.mxu0 0.0
    %247 = vmatpush1.msra.mxu0 %v215
    %248 = vmatprep.subr.mxu0 0.0
    %249 = vmatpush1.msra.mxu0 0.0
    %250 = vmatprep.subr.mxu0 0.0
    %251 = vmatpush1.msra.mxu0 0.0
    %252 = vmatprep.subr.mxu0 0.0
    %253 = vmatpush1.msra.mxu0 0.0
    %254 = vmatprep.subr.mxu0 0.0
    %255 = vmatpush1.msra.mxu0 0.0
    %256 = vmatprep.subr.mxu0 0.0
    %257 = vmatpush1.msra.mxu0 0.0
    %258 = vmatprep.subr.mxu0 0.0
    %259 = vmatpush1.msra.mxu0 0.0
    %260 = vmatprep.subr.mxu0 0.0
    %261 = vmatpush1.msra.mxu0 0.0
    %262 = vmatprep.subr.mxu0 0.0
    %263 = vmatpush1.msra.mxu0 0.0
    %264 = vmatprep.subr.mxu0 0.0
    %265 = vmatpush1.msra.mxu0 0.0
    %266 = vmatprep.subr.mxu0 0.0
    %267 = vmatpush1.msra.mxu0 0.0
    %268 = vmatprep.subr.mxu0 0.0
    %269 = vmatpush1.msra.mxu0 0.0
    %270 = vmatprep.subr.mxu0 0.0
    %271 = vmatpush1.msra.mxu0 0.0
    %272 = vmatprep.subr.mxu0 0.0
    %273 = vmatpush1.msra.mxu0 0.0
    %274 = vmatprep.subr.mxu0 0.0
    %275 = vmatpush1.msra.mxu0 0.0
    %276 = vmatprep.subr.mxu0 0.0
    %277 = vmatpush1.msra.mxu0 0.0
    %278 = vmatprep.subr.mxu0 0.0
    %279 = vmatpush1.msra.mxu0 0.0
    %280 = vmatprep.mubr.f32.mxu0 0.0
    %281 = vmatmul.mubr.f32.gmra.mrb[0].mxu0 %v199
    %v282 = vpop.f32.mrb[0].mxu0
    %v283 = vadd.f32 0.0, %v282
    %v284 = vpop.f32.mrb[0].mxu0
    %285 = vdwg.mxu0
    %v286 = vld [vmem:[%s90] sm:$0xff]
    %v287 = vmul.f32 %v283, %v286
    %vm288 = vcmask 31744
    %v289 = vsel %vm288, %v287, 0.0
    %v290 = vrot.slane %v289, 4
    %v291 = vadd.f32 %v289, %v290
    %v292 = vrot.slane %v291, 2
    %v293 = vadd.f32 %v291, %v292
    %v294 = vrot.slane %v293, 1
    %v295 = vadd.f32 %v293, %v294
    %v296 = vmul.f32 %v287, %v287
    %v297 = vsel %vm288, %v296, 0.0
    %v298 = vrot.slane %v297, 4
    %v299 = vadd.f32 %v297, %v298
    %v300 = vrot.slane %v299, 2
    %v301 = vadd.f32 %v299, %v300
    %v302 = vrot.slane %v301, 1
    %v303 = vadd.f32 %v301, %v302
    %p304 = scmp.eq.s32.totalorder 0, 0
    // Predicated region
    $region22: #{tpu_custom_call.1} parent=1 // pred_check
      %p305 = pneg %p304
    $region23: #{tpu_custom_call.1} parent=1 // pred_check_branch
      %307 = sbr.rel (%p305) target = $region25
    $region24: #{tpu_custom_call.1} parent=1 // pred_region
      %vm308 = vcmask 24576
      %309 = vst.msk [vmem:[#allocation2] sm:$0x1] %vm308, 0.0
      %310 = vst.msk [vmem:[#allocation4] sm:$0x1] %vm308, 0.0
    $region25: #{tpu_custom_call.1} parent=1 // pred_fallthru
      _
    %v311 = vld [vmem:[#allocation2] sm:$0x1]
    %v312 = vadd.f32 %v311, %v295
    %vm313 = vcmask 24576
    %314 = vst.msk [vmem:[#allocation2] sm:$0x1] %vm313, %v312
    %v315 = vld [vmem:[#allocation4] sm:$0x1]
    %v316 = vadd.f32 %v315, %v303
    %317 = vst.msk [vmem:[#allocation4] sm:$0x1] %vm313, %v316
    // Predicated region
    $region26: #{tpu_custom_call.1} parent=1 // pred_check
      _
    $region27: #{tpu_custom_call.1} parent=1 // pred_check_branch
      %319 = sbr.rel (0) target = $region29
    $region28: #{tpu_custom_call.1} parent=1 // pred_region
      %s321 = ssub.s32 16, 16
      %322 = vsyncadd [#allocation3], %s321
      %s324 = sshll.u32 [#allocation2], 4
      %s325 = int_to_ptr.vmem [resolvable:$true] %s324
      %327 = dma.vmem_to_hbm [thread:$0]  %s325, 16, %s5, [#allocation3]
    $region29: #{tpu_custom_call.1} parent=1 // pred_fallthru
      _
    // Predicated region
    $region30: #{tpu_custom_call.1} parent=1 // pred_check
      _
    $region31: #{tpu_custom_call.1} parent=1 // pred_check_branch
      %329 = sbr.rel (0) target = $region33
    $region32: #{tpu_custom_call.1} parent=1 // pred_region
      %s331 = ssub.s32 16, 16
      %332 = vsyncadd [#allocation5], %s331
      %s334 = sshll.u32 [#allocation4], 4
      %s335 = int_to_ptr.vmem [resolvable:$true] %s334
      %337 = dma.vmem_to_hbm [thread:$0]  %s335, 16, %s6, [#allocation5]
    $region33: #{tpu_custom_call.1} parent=1 // pred_fallthru
      _
    // Predicated region
    $region34: #{tpu_custom_call.1} parent=1 // pred_check
      _
    $region35: #{tpu_custom_call.1} parent=1 // pred_check_branch
      %339 = sbr.rel (0) target = $region37
    $region36: #{tpu_custom_call.1} parent=1 // pred_region
      %340 = dma.done [#allocation3], 16
    $region37: #{tpu_custom_call.1} parent=1 // pred_fallthru
      _
    // Predicated region
    $region38: #{tpu_custom_call.1} parent=1 // pred_check
      _
    $region39: #{tpu_custom_call.1} parent=1 // pred_check_branch
      %342 = sbr.rel (0) target = $region41
    $region40: #{tpu_custom_call.1} parent=1 // pred_region
      %343 = dma.done [#allocation5], 16
    $region41: #{tpu_custom_call.1} parent=1 // pred_fallthru
      _
    %344 = vsyncpa [#allocation3], 1
    %345 = vsyncpa [#allocation5], 1

</llo_original>
